<compile_context>
chip_gen: v6e
topology: v6e:2x2x1
jax: 0.10.0
libtpu: 0.0.40
codegen_flags: <defaults>
</compile_context>

<pallas_src>
import math

import jax
import jax.numpy as jnp
from jax.experimental import pallas as pl
from jax.experimental.pallas import tpu as pltpu


def _round_up(a, b):
    return ((a + b - 1) // b) * b


# --------------------------------------------------------------------------
# Kernel A: support = x @ W     (run once; row-tiled, weight resident)
# --------------------------------------------------------------------------
def _support_kernel(x_ref, w_ref, s_ref):
    s_ref[...] = jnp.dot(
        x_ref[...], w_ref[...], preferred_element_type=jnp.float32
    ).astype(s_ref.dtype)


# --------------------------------------------------------------------------
# Kernel B: out = adj @ support + bias   (row-tile i parallel, k reduction)
# Accumulates directly into the f32 output block (resident across k).
# --------------------------------------------------------------------------
def _aggregate_kernel(adj_ref, s_ref, b_ref, o_ref):
    k = pl.program_id(1)

    @pl.when(k == 0)
    def _init():
        o_ref[...] = jnp.broadcast_to(b_ref[...], o_ref.shape)

    o_ref[...] += jnp.dot(
        adj_ref[...], s_ref[...], preferred_element_type=jnp.float32
    )


def graph_convolution(x, adj, weight, bias=None, *, tm=256, tk=512):
    """GCN forward: adj @ (x @ weight) + bias.

    x:      [N, F_in]     node features
    adj:    [N, N]        dense adjacency (torch.spmm == dense matmul here)
    weight: [F_in, F_out]
    bias:   [F_out] or None
    returns [N, F_out] float32
    """
    N, F_in = x.shape
    F_out = weight.shape[1]
    bf16 = jnp.bfloat16

    if bias is None:
        bias_arr = jnp.zeros((F_out,), jnp.float32)
    else:
        bias_arr = bias.astype(jnp.float32)

    # Lane-dense output columns.
    Fp = _round_up(F_out, 128)
    # Clamp tiles to the (128-aligned) problem size, then pad N so that both
    # tm and tk divide Np exactly.
    Np0 = _round_up(N, 128)
    tm = min(tm, Np0)
    tk = min(tk, Np0)
    Np = _round_up(N, math.lcm(tm, tk))

    # --- small parameter padding (cheap) ---
    if Fp != F_out:
        w_b = jnp.zeros((F_in, Fp), bf16).at[:, :F_out].set(weight.astype(bf16))
        b_p = jnp.zeros((1, Fp), jnp.float32).at[0, :F_out].set(bias_arr)
    else:
        w_b = weight.astype(bf16)
        b_p = bias_arr[None, :]

    # --- x: cast to bf16, pad rows only if needed (x is small vs adj) ---
    x_b = x.astype(bf16)
    if Np != N:
        x_b = jnp.zeros((Np, F_in), bf16).at[:N, :].set(x_b)

    # --- adj: avoid full re-materialization when already tile aligned ---
    adj_b = adj if adj.dtype == bf16 else adj.astype(bf16)
    if Np != N:
        adj_b = jnp.zeros((Np, Np), bf16).at[:N, :N].set(adj_b)

    # ---------------- Kernel A: support = x @ W ----------------
    support = pl.pallas_call(
        _support_kernel,
        out_shape=jax.ShapeDtypeStruct((Np, Fp), bf16),
        grid_spec=pltpu.PrefetchScalarGridSpec(
            num_scalar_prefetch=0,
            grid=(Np // tm,),
            in_specs=[
                pl.BlockSpec((tm, F_in), lambda i: (i, 0)),   # x row tile
                pl.BlockSpec((F_in, Fp), lambda i: (0, 0)),   # weight (resident)
            ],
            out_specs=pl.BlockSpec((tm, Fp), lambda i: (i, 0)),
        ),
        compiler_params=pltpu.CompilerParams(
            dimension_semantics=("parallel",),
        ),
        cost_estimate=pl.CostEstimate(
            flops=2 * Np * F_in * Fp,
            transcendentals=0,
            bytes_accessed=Np * F_in * 2 + F_in * Fp * 2 + Np * Fp * 2,
        ),
    )(x_b, w_b)

    # ---------------- Kernel B: out = adj @ support + bias ----------------
    out_p = pl.pallas_call(
        _aggregate_kernel,
        out_shape=jax.ShapeDtypeStruct((Np, Fp), jnp.float32),
        grid_spec=pltpu.PrefetchScalarGridSpec(
            num_scalar_prefetch=0,
            grid=(Np // tm, Np // tk),
            in_specs=[
                pl.BlockSpec((tm, tk), lambda i, k: (i, k)),   # adj tile
                pl.BlockSpec((tk, Fp), lambda i, k: (k, 0)),   # support K-tile
                pl.BlockSpec((1, Fp), lambda i, k: (0, 0)),    # bias (resident)
            ],
            out_specs=pl.BlockSpec((tm, Fp), lambda i, k: (i, 0)),
        ),
        compiler_params=pltpu.CompilerParams(
            dimension_semantics=("parallel", "arbitrary"),     # rows ||, K seq
        ),
        cost_estimate=pl.CostEstimate(
            flops=2 * Np * Np * Fp,
            transcendentals=0,
            bytes_accessed=Np * Np * 2 + Np * Fp * 2 + Fp * 4 + Np * Fp * 4,
        ),
    )(adj_b, support, b_p)

    # Slice off N / F_out zero padding.
    out = out_p
    if Np != N or Fp != F_out:
        out = out[:N, :F_out]
    return out.astype(x.dtype)


if __name__ == "__main__":
    # Small shapes consistent with the module: N nodes, in_features -> out_features.
    N, F_in, F_out = 256, 64, 32

    key = jax.random.PRNGKey(0)
    k_x, k_adj, k_w, k_b = jax.random.split(key, 4)

    # Parameters: uniform(-stdv, stdv), stdv = 1/sqrt(out_features) (reset_parameters).
    stdv = 1.0 / math.sqrt(F_out)
    weight = jax.random.uniform(k_w, (F_in, F_out), jnp.float32, -stdv, stdv)
    bias = jax.random.uniform(k_b, (F_out,), jnp.float32, -stdv, stdv)

    # Inputs: node features and a dense adjacency with self-loops.
    x = jax.random.normal(k_x, (N, F_in), jnp.float32)
    adj_raw = (jax.random.uniform(k_adj, (N, N), jnp.float32) > 0.8).astype(jnp.float32)
    adj = adj_raw + jnp.eye(N, dtype=jnp.float32)

    out = graph_convolution(x, adj, weight, bias)
    out = jax.block_until_ready(out)
    assert out.shape == (N, F_out)

    # Reference with the same bf16-operand / f32-accumulate math as the kernels.
    bf16 = jnp.bfloat16
    ref_support = jnp.dot(x.astype(bf16), weight.astype(bf16),
                          preferred_element_type=jnp.float32).astype(bf16)
    ref_bf16 = jnp.dot(adj.astype(bf16), ref_support,
                       preferred_element_type=jnp.float32) + bias
    assert jnp.allclose(out, ref_bf16, atol=5e-3, rtol=5e-3), "mismatch vs bf16 reference"

    # Loose sanity check against the exact f32 math of the original module.
    # (bf16 rounding error grows with node degree; acceptable for GCN.)
    ref_f32 = adj @ (x @ weight) + bias
    assert jnp.allclose(out, ref_f32, atol=0.5, rtol=0.0), "mismatch vs f32 reference"

    print("KERNEL_OK")
</pallas_src>

<mosaic_0001>
module attributes {stable_mosaic.version = 11 : i64} {
  func.func @_support_kernel(%arg0: i32, %arg1: memref<256x64xbf16, #tpu.memory_space<vmem>>, %arg2: memref<64x128xbf16, #tpu.memory_space<vmem>>, %arg3: memref<256x128xbf16, #tpu.memory_space<vmem>>) attributes {dimension_semantics = [#tpu.dimension_semantics<parallel>], iteration_bounds = array<i64: 1>, scalar_prefetch = 0 : i64, scratch_operands = 0 : i64, tpu.core_type = #tpu.core_type<tc>, window_params = [{transform_indices = @transform_0, window_bounds = array<i64: 256, 64>}, {pipeline_mode = #tpu.pipeline_mode<synchronous>, transform_indices = @transform_1, window_bounds = array<i64: 64, 128>}, {transform_indices = @transform_2, window_bounds = array<i64: 256, 128>}]} {
    %c0 = arith.constant 0 : index
    %c0_0 = arith.constant 0 : index
    %0 = vector.load %arg1[%c0, %c0_0] : memref<256x64xbf16, #tpu.memory_space<vmem>>, vector<256x64xbf16>
    %c0_1 = arith.constant 0 : index
    %c0_2 = arith.constant 0 : index
    %1 = vector.load %arg2[%c0_1, %c0_2] : memref<64x128xbf16, #tpu.memory_space<vmem>>, vector<64x128xbf16>
    %cst = arith.constant dense<0.000000e+00> : vector<256x128xf32>
    %2 = tpu.matmul %0, %1, %cst {dimension_numbers = #tpu.dot_dimension_numbers<[1], [0], [0], [1], [0, 0, 1, 1], [], []>} : vector<256x64xbf16>, vector<64x128xbf16>, vector<256x128xf32> -> vector<256x128xf32>
    %3 = arith.truncf %2 : vector<256x128xf32> to vector<256x128xbf16>
    %c0_3 = arith.constant 0 : index
    %c0_4 = arith.constant 0 : index
    %4 = vector.load %arg3[%c0_3, %c0_4] : memref<256x128xbf16, #tpu.memory_space<vmem>>, vector<256x128xbf16>
    tpu.vector_store %arg3[%c0_3, %c0_4], %3 {strides = array<i32>} : memref<256x128xbf16, #tpu.memory_space<vmem>>, vector<256x128xbf16>,
    return
  }
  func.func @transform_0(%arg0: i32) -> (i32, i32) {
    %c0_i32 = arith.constant 0 : i32
    %c0_i32_0 = arith.constant 0 : i32
    return %arg0, %c0_i32 : i32, i32
  }
  func.func @transform_1(%arg0: i32) -> (i32, i32) {
    %c0_i32 = arith.constant 0 : i32
    %c0_i32_0 = arith.constant 0 : i32
    %c0_i32_1 = arith.constant 0 : i32
    return %c0_i32, %c0_i32_0 : i32, i32
  }
  func.func @transform_2(%arg0: i32) -> (i32, i32) {
    %c0_i32 = arith.constant 0 : i32
    %c0_i32_0 = arith.constant 0 : i32
    return %arg0, %c0_i32 : i32, i32
  }
}

</mosaic_0001>

<llo_original>
// kernel: tpu_custom_call.1
$region0: #{tpu_custom_call.1}
  #allocation0 [shape = 'u32[]', space=smem, size = 0x4, offset = 0x4, fixed_abs, tag = 'smem constant byte address 0x4 - core index']
  #allocation1 [shape = 'u32[144,128]{1,0:T(1,128)}', space=vmem, size = 0x12000, scoped, tag = 'internal scratch']
  %s0 = inlined_call_operand.vmem [shape: bf16[256,64], index: 0, kind: input, shape index: {}]
  %s1 = inlined_call_operand.vmem [shape: bf16[64,128], index: 1, kind: input, shape index: {}]
  %s2 = inlined_call_operand.hbm [shape: bf16[256,128], index: 2, kind: output, shape index: {}]
  %s3 = sld [smem:[#allocation0]]
  $region18: #{tpu_custom_call.1} parent=0
    _
  %s5 = ssub.s32 1, %s3
  %s6 = scalar_select 0, %s5, %s3
  $region1: #{tpu_custom_call.1} parent=0
    #allocation2 [shape = 'u8[65536]{0}', space=vmem, size = 0x10000, scoped, tag = 'output window, operand 0, single buffered']
    #allocation3 [shape = 's32[1]{0}', space=sflag, size = 0x4, scoped, tag = 'scoped memory for tpu_custom_call.1']
    %7 = vsyncpa [#allocation3], 0
    // Predicated region
    $region2: #{tpu_custom_call.1} parent=1 // pred_check
      _
    $region3: #{tpu_custom_call.1} parent=1 // pred_check_branch
      %9 = sbr.rel (0) target = $region5
    $region4: #{tpu_custom_call.1} parent=1 // pred_region
      _
    $region5: #{tpu_custom_call.1} parent=1 // pred_fallthru
      _
    // Predicated region
    $region6: #{tpu_custom_call.1} parent=1 // pred_check
      _
    $region7: #{tpu_custom_call.1} parent=1 // pred_check_branch
      %11 = sbr.rel (0) target = $region9
    $region8: #{tpu_custom_call.1} parent=1 // pred_region
      _
    $region9: #{tpu_custom_call.1} parent=1 // pred_fallthru
      _
    %v13 = vld [vmem:[%s0] sm:$0xf]
    %v14 = vld [vmem:[%s0 + $0x4] sm:$0xf]
    %v15 = vld [vmem:[%s0 + $0x8] sm:$0xf]
    %v16 = vld [vmem:[%s0 + $0xc] sm:$0xf]
    %v17 = vld [vmem:[%s0 + $0x10] sm:$0xf]
    %v18 = vld [vmem:[%s0 + $0x14] sm:$0xf]
    %v19 = vld [vmem:[%s0 + $0x18] sm:$0xf]
    %v20 = vld [vmem:[%s0 + $0x1c] sm:$0xf]
    %v21 = vld [vmem:[%s0 + $0x20] sm:$0xf]
    %v22 = vld [vmem:[%s0 + $0x24] sm:$0xf]
    %v23 = vld [vmem:[%s0 + $0x28] sm:$0xf]
    %v24 = vld [vmem:[%s0 + $0x2c] sm:$0xf]
    %v25 = vld [vmem:[%s0 + $0x30] sm:$0xf]
    %v26 = vld [vmem:[%s0 + $0x34] sm:$0xf]
    %v27 = vld [vmem:[%s0 + $0x38] sm:$0xf]
    %v28 = vld [vmem:[%s0 + $0x3c] sm:$0xf]
    %v29 = vld [vmem:[%s0 + $0x40] sm:$0xf]
    %v30 = vld [vmem:[%s0 + $0x44] sm:$0xf]
    %v31 = vld [vmem:[%s0 + $0x48] sm:$0xf]
    %v32 = vld [vmem:[%s0 + $0x4c] sm:$0xf]
    %v33 = vld [vmem:[%s0 + $0x50] sm:$0xf]
    %v34 = vld [vmem:[%s0 + $0x54] sm:$0xf]
    %v35 = vld [vmem:[%s0 + $0x58] sm:$0xf]
    %v36 = vld [vmem:[%s0 + $0x5c] sm:$0xf]
    %v37 = vld [vmem:[%s0 + $0x60] sm:$0xf]
    %v38 = vld [vmem:[%s0 + $0x64] sm:$0xf]
    %v39 = vld [vmem:[%s0 + $0x68] sm:$0xf]
    %v40 = vld [vmem:[%s0 + $0x6c] sm:$0xf]
    %v41 = vld [vmem:[%s0 + $0x70] sm:$0xf]
    %v42 = vld [vmem:[%s0 + $0x74] sm:$0xf]
    %v43 = vld [vmem:[%s0 + $0x78] sm:$0xf]
    %v44 = vld [vmem:[%s0 + $0x7c] sm:$0xf]
    %v45 = vld [vmem:[%s1] sm:$0xf]
    %v46 = vld [vmem:[%s1 + $0x4] sm:$0xf]
    %v47 = vld [vmem:[%s1 + $0x8] sm:$0xf]
    %v48 = vld [vmem:[%s1 + $0xc] sm:$0xf]
    %v49 = vld [vmem:[%s1 + $0x10] sm:$0xf]
    %v50 = vld [vmem:[%s1 + $0x14] sm:$0xf]
    %v51 = vld [vmem:[%s1 + $0x18] sm:$0xf]
    %v52 = vld [vmem:[%s1 + $0x1c] sm:$0xf]
    %v85 = vunpack.c.l.b16 %v13
    %v86 = vunpack.c.l.b16 %v14
    %v87 = vunpack.c.l.b16 %v15
    %v88 = vunpack.c.l.b16 %v16
    %v89 = vunpack.c.l.b16 %v17
    %v90 = vunpack.c.l.b16 %v18
    %v91 = vunpack.c.l.b16 %v19
    %v92 = vunpack.c.l.b16 %v20
    %v93 = vunpack.c.l.b16 %v21
    %v94 = vunpack.c.l.b16 %v22
    %v95 = vunpack.c.l.b16 %v23
    %v96 = vunpack.c.l.b16 %v24
    %v97 = vunpack.c.l.b16 %v25
    %v98 = vunpack.c.l.b16 %v26
    %v99 = vunpack.c.l.b16 %v27
    %v100 = vunpack.c.l.b16 %v28
    %v101 = vunpack.c.l.b16 %v29
    %v102 = vunpack.c.l.b16 %v30
    %v103 = vunpack.c.l.b16 %v31
    %v104 = vunpack.c.l.b16 %v32
    %v105 = vunpack.c.l.b16 %v33
    %v106 = vunpack.c.l.b16 %v34
    %v107 = vunpack.c.l.b16 %v35
    %v108 = vunpack.c.l.b16 %v36
    %v109 = vunpack.c.l.b16 %v37
    %v110 = vunpack.c.l.b16 %v38
    %v111 = vunpack.c.l.b16 %v39
    %v112 = vunpack.c.l.b16 %v40
    %v113 = vunpack.c.l.b16 %v41
    %v114 = vunpack.c.l.b16 %v42
    %v115 = vunpack.c.l.b16 %v43
    %v116 = vunpack.c.l.b16 %v44
    %v117 = vpack.c.b16 %v86, %v85
    %v118 = vpack.c.b16 %v88, %v87
    %v119 = vpack.c.b16 %v90, %v89
    %v120 = vpack.c.b16 %v92, %v91
    %v121 = vpack.c.b16 %v94, %v93
    %v122 = vpack.c.b16 %v96, %v95
    %v123 = vpack.c.b16 %v98, %v97
    %v124 = vpack.c.b16 %v100, %v99
    %v125 = vpack.c.b16 %v102, %v101
    %v126 = vpack.c.b16 %v104, %v103
    %v127 = vpack.c.b16 %v106, %v105
    %v128 = vpack.c.b16 %v108, %v107
    %v129 = vpack.c.b16 %v110, %v109
    %v130 = vpack.c.b16 %v112, %v111
    %v131 = vpack.c.b16 %v114, %v113
    %v132 = vpack.c.b16 %v116, %v115
    %v141 = vunpack.c.l.b16 %v45
    %v142 = vunpack.c.l.b16 %v46
    %v143 = vunpack.c.l.b16 %v47
    %v144 = vunpack.c.l.b16 %v48
    %v145 = vunpack.c.l.b16 %v49
    %v146 = vunpack.c.l.b16 %v50
    %v147 = vunpack.c.l.b16 %v51
    %v148 = vunpack.c.l.b16 %v52
    %v149 = vpack.c.b16 %v142, %v141
    %v150 = vpack.c.b16 %v144, %v143
    %v151 = vpack.c.b16 %v146, %v145
    %v152 = vpack.c.b16 %v148, %v147
    %vm157 = vcmask 523264
    %v159 = vsel %vm157, %v117, 0
    %v162 = vsel %vm157, %v118, 0
    %v165 = vsel %vm157, %v119, 0
    %v168 = vsel %vm157, %v120, 0
    %v171 = vsel %vm157, %v121, 0
    %v174 = vsel %vm157, %v122, 0
    %v177 = vsel %vm157, %v123, 0
    %v180 = vsel %vm157, %v124, 0
    %v183 = vsel %vm157, %v125, 0
    %v186 = vsel %vm157, %v126, 0
    %v189 = vsel %vm157, %v127, 0
    %v192 = vsel %vm157, %v128, 0
    %v195 = vsel %vm157, %v129, 0
    %v198 = vsel %vm157, %v130, 0
    %v201 = vsel %vm157, %v131, 0
    %v204 = vsel %vm157, %v132, 0
    %206 = vmatprep.subr.bf16.mxu0 0
    %207 = vmatpush1.bf16.msra.mxu0 0
    %208 = vmatprep.subr.bf16.mxu0 0
    %209 = vmatpush1.bf16.msra.mxu0 0
    %210 = vmatprep.subr.bf16.mxu0 0
    %211 = vmatpush1.bf16.msra.mxu0 0
    %212 = vmatprep.subr.bf16.mxu0 0
    %213 = vmatpush1.bf16.msra.mxu0 0
    %214 = vmatprep.subr.bf16.mxu0 0
    %215 = vmatpush1.bf16.msra.mxu0 %v152
    %216 = vmatprep.subr.bf16.mxu0 0
    %217 = vmatpush1.bf16.msra.mxu0 %v151
    %218 = vmatprep.subr.bf16.mxu0 0
    %219 = vmatpush1.bf16.msra.mxu0 %v150
    %220 = vmatprep.subr.bf16.mxu0 0
    %221 = vmatpush1.bf16.msra.mxu0 %v149
    %222 = vmatprep.subr.bf16.mxu0 0
    %223 = vmatpush2.bf16.msra.mxu0 0
    %224 = vmatprep.subr.bf16.mxu0 0
    %225 = vmatpush2.bf16.msra.mxu0 0
    %226 = vmatprep.subr.bf16.mxu0 0
    %227 = vmatpush2.bf16.msra.mxu0 0
    %228 = vmatprep.subr.bf16.mxu0 0
    %229 = vmatpush2.bf16.msra.mxu0 0
    %230 = vmatprep.subr.bf16.mxu0 0
    %231 = vmatpush2.bf16.msra.mxu0 0
    %232 = vmatprep.subr.bf16.mxu0 0
    %233 = vmatpush2.bf16.msra.mxu0 0
    %234 = vmatprep.subr.bf16.mxu0 0
    %235 = vmatpush2.bf16.msra.mxu0 0
    %236 = vmatprep.subr.bf16.mxu0 0
    %237 = vmatpush2.bf16.msra.mxu0 0
    %238 = vmatprep.mubr.bf16.mxu0 0
    %239 = vmatmul.mubr.bf16.gmra.mxu0 %v159
    %v240 = vpop.f32.mrf.mxu0
    %v241 = vadd.f32 0.0, %v240
    %v242 = vpop.f32.mrf.mxu0
    %v243 = vpop.f32.mrf.mxu0
    %v244 = vadd.f32 0.0, %v243
    %v245 = vpop.f32.mrf.mxu0
    %246 = vmatprep.mubr.bf16.mxu0 0
    %247 = vmatmul.mubr.bf16.gmra.mxu0 %v162
    %v248 = vpop.f32.mrf.mxu0
    %v249 = vadd.f32 0.0, %v248
    %v250 = vpop.f32.mrf.mxu0
    %v251 = vpop.f32.mrf.mxu0
    %v252 = vadd.f32 0.0, %v251
    %v253 = vpop.f32.mrf.mxu0
    %254 = vmatprep.mubr.bf16.mxu0 0
    %255 = vmatmul.mubr.bf16.gmra.mxu0 %v165
    %v256 = vpop.f32.mrf.mxu0
    %v257 = vadd.f32 0.0, %v256
    %v258 = vpop.f32.mrf.mxu0
    %v259 = vpop.f32.mrf.mxu0
    %v260 = vadd.f32 0.0, %v259
    %v261 = vpop.f32.mrf.mxu0
    %262 = vmatprep.mubr.bf16.mxu0 0
    %263 = vmatmul.mubr.bf16.gmra.mxu0 %v168
    %v264 = vpop.f32.mrf.mxu0
    %v265 = vadd.f32 0.0, %v264
    %v266 = vpop.f32.mrf.mxu0
    %v267 = vpop.f32.mrf.mxu0
    %v268 = vadd.f32 0.0, %v267
    %v269 = vpop.f32.mrf.mxu0
    %270 = vmatprep.mubr.bf16.mxu0 0
    %271 = vmatmul.mubr.bf16.gmra.mxu0 %v171
    %v272 = vpop.f32.mrf.mxu0
    %v273 = vadd.f32 0.0, %v272
    %v274 = vpop.f32.mrf.mxu0
    %v275 = vpop.f32.mrf.mxu0
    %v276 = vadd.f32 0.0, %v275
    %v277 = vpop.f32.mrf.mxu0
    %278 = vmatprep.mubr.bf16.mxu0 0
    %279 = vmatmul.mubr.bf16.gmra.mxu0 %v174
    %v280 = vpop.f32.mrf.mxu0
    %v281 = vadd.f32 0.0, %v280
    %v282 = vpop.f32.mrf.mxu0
    %v283 = vpop.f32.mrf.mxu0
    %v284 = vadd.f32 0.0, %v283
    %v285 = vpop.f32.mrf.mxu0
    %286 = vmatprep.mubr.bf16.mxu0 0
    %287 = vmatmul.mubr.bf16.gmra.mxu0 %v177
    %v288 = vpop.f32.mrf.mxu0
    %v289 = vadd.f32 0.0, %v288
    %v290 = vpop.f32.mrf.mxu0
    %v291 = vpop.f32.mrf.mxu0
    %v292 = vadd.f32 0.0, %v291
    %v293 = vpop.f32.mrf.mxu0
    %294 = vmatprep.mubr.bf16.mxu0 0
    %295 = vmatmul.mubr.bf16.gmra.mxu0 %v180
    %v296 = vpop.f32.mrf.mxu0
    %v297 = vadd.f32 0.0, %v296
    %v298 = vpop.f32.mrf.mxu0
    %v299 = vpop.f32.mrf.mxu0
    %v300 = vadd.f32 0.0, %v299
    %v301 = vpop.f32.mrf.mxu0
    %302 = vmatprep.mubr.bf16.mxu0 0
    %303 = vmatmul.mubr.bf16.gmra.mxu0 %v183
    %v304 = vpop.f32.mrf.mxu0
    %v305 = vadd.f32 0.0, %v304
    %v306 = vpop.f32.mrf.mxu0
    %v307 = vpop.f32.mrf.mxu0
    %v308 = vadd.f32 0.0, %v307
    %v309 = vpop.f32.mrf.mxu0
    %310 = vmatprep.mubr.bf16.mxu0 0
    %311 = vmatmul.mubr.bf16.gmra.mxu0 %v186
    %v312 = vpop.f32.mrf.mxu0
    %v313 = vadd.f32 0.0, %v312
    %v314 = vpop.f32.mrf.mxu0
    %v315 = vpop.f32.mrf.mxu0
    %v316 = vadd.f32 0.0, %v315
    %v317 = vpop.f32.mrf.mxu0
    %318 = vmatprep.mubr.bf16.mxu0 0
    %319 = vmatmul.mubr.bf16.gmra.mxu0 %v189
    %v320 = vpop.f32.mrf.mxu0
    %v321 = vadd.f32 0.0, %v320
    %v322 = vpop.f32.mrf.mxu0
    %v323 = vpop.f32.mrf.mxu0
    %v324 = vadd.f32 0.0, %v323
    %v325 = vpop.f32.mrf.mxu0
    %326 = vmatprep.mubr.bf16.mxu0 0
    %327 = vmatmul.mubr.bf16.gmra.mxu0 %v192
    %v328 = vpop.f32.mrf.mxu0
    %v329 = vadd.f32 0.0, %v328
    %v330 = vpop.f32.mrf.mxu0
    %v331 = vpop.f32.mrf.mxu0
    %v332 = vadd.f32 0.0, %v331
    %v333 = vpop.f32.mrf.mxu0
    %334 = vmatprep.mubr.bf16.mxu0 0
    %335 = vmatmul.mubr.bf16.gmra.mxu0 %v195
    %v336 = vpop.f32.mrf.mxu0
    %v337 = vadd.f32 0.0, %v336
    %v338 = vpop.f32.mrf.mxu0
    %v339 = vpop.f32.mrf.mxu0
    %v340 = vadd.f32 0.0, %v339
    %v341 = vpop.f32.mrf.mxu0
    %342 = vmatprep.mubr.bf16.mxu0 0
    %343 = vmatmul.mubr.bf16.gmra.mxu0 %v198
    %v344 = vpop.f32.mrf.mxu0
    %v345 = vadd.f32 0.0, %v344
    %v346 = vpop.f32.mrf.mxu0
    %v347 = vpop.f32.mrf.mxu0
    %v348 = vadd.f32 0.0, %v347
    %v349 = vpop.f32.mrf.mxu0
    %350 = vmatprep.mubr.bf16.mxu0 0
    %351 = vmatmul.mubr.bf16.gmra.mxu0 %v201
    %v352 = vpop.f32.mrf.mxu0
    %v353 = vadd.f32 0.0, %v352
    %v354 = vpop.f32.mrf.mxu0
    %v355 = vpop.f32.mrf.mxu0
    %v356 = vadd.f32 0.0, %v355
    %v357 = vpop.f32.mrf.mxu0
    %358 = vmatprep.mubr.bf16.mxu0 0
    %359 = vmatmul.mubr.bf16.gmra.mxu0 %v204
    %v360 = vpop.f32.mrf.mxu0
    %v361 = vadd.f32 0.0, %v360
    %v362 = vpop.f32.mrf.mxu0
    %v363 = vpop.f32.mrf.mxu0
    %v364 = vadd.f32 0.0, %v363
    %v365 = vpop.f32.mrf.mxu0
    %366 = vdwg.mxu0
    %v367 = vpack.c.bf16 %v244, %v241
    %v368 = vpack.c.bf16 %v252, %v249
    %v369 = vpack.c.bf16 %v260, %v257
    %v370 = vpack.c.bf16 %v268, %v265
    %v371 = vpack.c.bf16 %v276, %v273
    %v372 = vpack.c.bf16 %v284, %v281
    %v373 = vpack.c.bf16 %v292, %v289
    %v374 = vpack.c.bf16 %v300, %v297
    %v375 = vpack.c.bf16 %v308, %v305
    %v376 = vpack.c.bf16 %v316, %v313
    %v377 = vpack.c.bf16 %v324, %v321
    %v378 = vpack.c.bf16 %v332, %v329
    %v379 = vpack.c.bf16 %v340, %v337
    %v380 = vpack.c.bf16 %v348, %v345
    %v381 = vpack.c.bf16 %v356, %v353
    %v382 = vpack.c.bf16 %v364, %v361
    %v399 = vunpack.c.l.b16 %v367
    %v400 = vunpack.c.h.b16 %v367
    %v401 = vunpack.c.l.b16 %v368
    %v402 = vunpack.c.h.b16 %v368
    %v403 = vunpack.c.l.b16 %v369
    %v404 = vunpack.c.h.b16 %v369
    %v405 = vunpack.c.l.b16 %v370
    %v406 = vunpack.c.h.b16 %v370
    %v407 = vunpack.c.l.b16 %v371
    %v408 = vunpack.c.h.b16 %v371
    %v409 = vunpack.c.l.b16 %v372
    %v410 = vunpack.c.h.b16 %v372
    %v411 = vunpack.c.l.b16 %v373
    %v412 = vunpack.c.h.b16 %v373
    %v413 = vunpack.c.l.b16 %v374
    %v414 = vunpack.c.h.b16 %v374
    %v415 = vunpack.c.l.b16 %v375
    %v416 = vunpack.c.h.b16 %v375
    %v417 = vunpack.c.l.b16 %v376
    %v418 = vunpack.c.h.b16 %v376
    %v419 = vunpack.c.l.b16 %v377
    %v420 = vunpack.c.h.b16 %v377
    %v421 = vunpack.c.l.b16 %v378
    %v422 = vunpack.c.h.b16 %v378
    %v423 = vunpack.c.l.b16 %v379
    %v424 = vunpack.c.h.b16 %v379
    %v425 = vunpack.c.l.b16 %v380
    %v426 = vunpack.c.h.b16 %v380
    %v427 = vunpack.c.l.b16 %v381
    %v428 = vunpack.c.h.b16 %v381
    %v429 = vunpack.c.l.b16 %v382
    %v430 = vunpack.c.h.b16 %v382
    %v431 = vpack.c.b16 %v399, %v399
    %v432 = vpack.c.b16 %v400, %v400
    %v433 = vpack.c.b16 %v401, %v401
    %v434 = vpack.c.b16 %v402, %v402
    %v435 = vpack.c.b16 %v403, %v403
    %v436 = vpack.c.b16 %v404, %v404
    %v437 = vpack.c.b16 %v405, %v405
    %v438 = vpack.c.b16 %v406, %v406
    %v439 = vpack.c.b16 %v407, %v407
    %v440 = vpack.c.b16 %v408, %v408
    %v441 = vpack.c.b16 %v409, %v409
    %v442 = vpack.c.b16 %v410, %v410
    %v443 = vpack.c.b16 %v411, %v411
    %v444 = vpack.c.b16 %v412, %v412
    %v445 = vpack.c.b16 %v413, %v413
    %v446 = vpack.c.b16 %v414, %v414
    %v447 = vpack.c.b16 %v415, %v415
    %v448 = vpack.c.b16 %v416, %v416
    %v449 = vpack.c.b16 %v417, %v417
    %v450 = vpack.c.b16 %v418, %v418
    %v451 = vpack.c.b16 %v419, %v419
    %v452 = vpack.c.b16 %v420, %v420
    %v453 = vpack.c.b16 %v421, %v421
    %v454 = vpack.c.b16 %v422, %v422
    %v455 = vpack.c.b16 %v423, %v423
    %v456 = vpack.c.b16 %v424, %v424
    %v457 = vpack.c.b16 %v425, %v425
    %v458 = vpack.c.b16 %v426, %v426
    %v459 = vpack.c.b16 %v427, %v427
    %v460 = vpack.c.b16 %v428, %v428
    %v461 = vpack.c.b16 %v429, %v429
    %v462 = vpack.c.b16 %v430, %v430
    %495 = vst [vmem:[#allocation2] sm:$0xf] %v431
    %496 = vst [vmem:[#allocation2 + $0x4] sm:$0xf] %v432
    %497 = vst [vmem:[#allocation2 + $0x8] sm:$0xf] %v433
    %498 = vst [vmem:[#allocation2 + $0xc] sm:$0xf] %v434
    %499 = vst [vmem:[#allocation2 + $0x10] sm:$0xf] %v435
    %500 = vst [vmem:[#allocation2 + $0x14] sm:$0xf] %v436
    %501 = vst [vmem:[#allocation2 + $0x18] sm:$0xf] %v437
    %502 = vst [vmem:[#allocation2 + $0x1c] sm:$0xf] %v438
    %503 = vst [vmem:[#allocation2 + $0x20] sm:$0xf] %v439
    %504 = vst [vmem:[#allocation2 + $0x24] sm:$0xf] %v440
    %505 = vst [vmem:[#allocation2 + $0x28] sm:$0xf] %v441
    %506 = vst [vmem:[#allocation2 + $0x2c] sm:$0xf] %v442
    %507 = vst [vmem:[#allocation2 + $0x30] sm:$0xf] %v443
    %508 = vst [vmem:[#allocation2 + $0x34] sm:$0xf] %v444
    %509 = vst [vmem:[#allocation2 + $0x38] sm:$0xf] %v445
    %510 = vst [vmem:[#allocation2 + $0x3c] sm:$0xf] %v446
    %511 = vst [vmem:[#allocation2 + $0x40] sm:$0xf] %v447
    %512 = vst [vmem:[#allocation2 + $0x44] sm:$0xf] %v448
    %513 = vst [vmem:[#allocation2 + $0x48] sm:$0xf] %v449
    %514 = vst [vmem:[#allocation2 + $0x4c] sm:$0xf] %v450
    %515 = vst [vmem:[#allocation2 + $0x50] sm:$0xf] %v451
    %516 = vst [vmem:[#allocation2 + $0x54] sm:$0xf] %v452
    %517 = vst [vmem:[#allocation2 + $0x58] sm:$0xf] %v453
    %518 = vst [vmem:[#allocation2 + $0x5c] sm:$0xf] %v454
    %519 = vst [vmem:[#allocation2 + $0x60] sm:$0xf] %v455
    %520 = vst [vmem:[#allocation2 + $0x64] sm:$0xf] %v456
    %521 = vst [vmem:[#allocation2 + $0x68] sm:$0xf] %v457
    %522 = vst [vmem:[#allocation2 + $0x6c] sm:$0xf] %v458
    %523 = vst [vmem:[#allocation2 + $0x70] sm:$0xf] %v459
    %524 = vst [vmem:[#allocation2 + $0x74] sm:$0xf] %v460
    %525 = vst [vmem:[#allocation2 + $0x78] sm:$0xf] %v461
    %526 = vst [vmem:[#allocation2 + $0x7c] sm:$0xf] %v462
    // Predicated region
    $region10: #{tpu_custom_call.1} parent=1 // pred_check
      _
    $region11: #{tpu_custom_call.1} parent=1 // pred_check_branch
      %528 = sbr.rel (0) target = $region13
    $region12: #{tpu_custom_call.1} parent=1 // pred_region
      %s530 = ssub.s32 2048, 2048
      %531 = vsyncadd [#allocation3], %s530
      %s532 = sshll.u32 [#allocation2], 4
      %s533 = int_to_ptr.vmem [resolvable:$true] %s532
      %538 = dma.vmem_to_hbm [thread:$0]  %s533, 2048, %s2, [#allocation3], 64, 64, 4
    $region13: #{tpu_custom_call.1} parent=1 // pred_fallthru
      _
    // Predicated region
    $region14: #{tpu_custom_call.1} parent=1 // pred_check
      _
    $region15: #{tpu_custom_call.1} parent=1 // pred_check_branch
      %540 = sbr.rel (0) target = $region17
    $region16: #{tpu_custom_call.1} parent=1 // pred_region
      %541 = dma.done [#allocation3], 2048
    $region17: #{tpu_custom_call.1} parent=1 // pred_fallthru
      _
    %542 = vsyncpa [#allocation3], 1

</llo_original>
